<compile_context>
chip_gen: v7x
topology: tpu7x:2x2x1
jax: 0.10.0
libtpu: 0.0.40
codegen_flags: <defaults>
</compile_context>

<pallas_src>
import functools

import jax
import jax.numpy as jnp
from jax.experimental import pallas as pl
from jax.experimental.pallas import tpu as pltpu


def lstm_mtm_kernel(x_ref, wih_ref, whh_ref, b_ref, wfc_ref, bfc_ref, out_ref,
                    *, seq_len, batch):
    """Single-program fused-gate LSTM recurrence + one FC + tanh epilogue.

    x_ref  : (T*B, D)   inputs, time-major rows (row = t*B + b)
    wih_ref: (D, 4H)    fused input weights, gate blocks [i|f|g|o]
    whh_ref: (H, 4H)    fused recurrent weights, gate blocks [i|f|g|o]
    b_ref  : (1, 4H)    fused bias (b_ih + b_hh)
    wfc_ref: (H, O)     fc weight, pre-transposed
    bfc_ref: (1, O)     fc bias
    out_ref: (T*B, O)   tanh(fc(h_t)), time-major rows (row = t*B + b)
    """
    f32 = jnp.float32
    T, B = seq_len, batch
    H, H4 = whh_ref.shape

    # Prologue: input projection for ALL timesteps at once — one lane-dense
    # (T*B, D) @ (D, 4H) matmul, independent of the recurrence.
    xp = jnp.dot(x_ref[...], wih_ref[...], preferred_element_type=f32) + b_ref[...]

    # Loop-invariant loads / constants hoisted above the unrolled loop.
    whh = whh_ref[...]                                        # (H, 4H)

    # Per-lane affine constants so one tanh over the fused (B, 4H) vreg yields
    # sigmoid on the i/f/o lanes (sigmoid(x) = 0.5*tanh(x/2) + 0.5) and plain
    # tanh on the g lanes.
    lane = jax.lax.broadcasted_iota(jnp.int32, (1, H4), 1)
    is_g = jnp.logical_and(lane >= 2 * H, lane < 3 * H)
    scale = jnp.where(is_g, 1.0, 0.5).astype(f32)             # pre & post scale
    shift = jnp.where(is_g, 0.0, 0.5).astype(f32)             # post shift

    h = jnp.zeros((B, H), f32)
    c = jnp.zeros((B, H), f32)
    hs = []

    # Fully-unrolled recurrence (T small & static).  Per step, only one
    # (B,H)@(H,4H) matmul, one tanh over the fused vreg, one tanh(c) and a few
    # VPU ops sit on the serial dependency chain.
    for t in range(T):
        z = jnp.dot(h, whh, preferred_element_type=f32) + xp[t * B:(t + 1) * B]
        gates = scale * jnp.tanh(scale * z) + shift           # (B, 4H)
        i_t = gates[:, 0:H]
        f_t = gates[:, H:2 * H]
        g_t = gates[:, 2 * H:3 * H]
        o_t = gates[:, 3 * H:4 * H]
        c = f_t * c + i_t * g_t
        h = o_t * jnp.tanh(c)
        hs.append(h)

    # Epilogue: one matmul + one store for the whole sequence batch.
    hs_all = jnp.concatenate(hs, axis=0)                      # (T*B, H)
    y = jnp.tanh(jnp.dot(hs_all, wfc_ref[...], preferred_element_type=f32)
                 + bfc_ref[...])                              # (T*B, O)
    out_ref[...] = y.astype(out_ref.dtype)


def doa_model_mtm_forward(x, params):
    """x: (B, T, input_dim) float32 (batch_first, like PyTorch). Returns (B, T, O)."""
    B, T, D = x.shape
    H = params["whh"].shape[0]
    O = params["wfc"].shape[-1]

    # Layout plumbing only (128 bytes, fused inside the same jit): time-major
    # rows so the kernel's per-step pre-activation slice is contiguous.
    x_tb = jnp.transpose(x, (1, 0, 2)).reshape(T * B, D)

    kernel = functools.partial(lstm_mtm_kernel, seq_len=T, batch=B)
    vmem_spec = pl.BlockSpec(memory_space=pltpu.MemorySpace.VMEM)

    out = pl.pallas_call(
        kernel,
        out_shape=jax.ShapeDtypeStruct((T * B, O), x.dtype),
        in_specs=[vmem_spec] * 6,
        out_specs=vmem_spec,
    )(x_tb, params["wih"], params["whh"], params["b"],
      params["wfc"], params["bfc"])

    # Back to batch-first (B, T, O) — tiny layout transpose in the wrapper.
    return jnp.transpose(out.reshape(T, B, O), (1, 0, 2))


def init_params(key, input_dim, hidden_dim, output_dim):
    """Deterministic synthetic params; shapes match nn.LSTM(num_layers=1) + nn.Linear."""
    ks = jax.random.split(key, 6)
    s = 1.0 / jnp.sqrt(hidden_dim)
    u = lambda k, shape: jax.random.uniform(k, shape, jnp.float32, -s, s)
    w_ih = u(ks[0], (4 * hidden_dim, input_dim))     # PyTorch weight_ih_l0 (rows i,f,g,o)
    w_hh = u(ks[1], (4 * hidden_dim, hidden_dim))    # PyTorch weight_hh_l0
    b_ih = u(ks[2], (4 * hidden_dim,))
    b_hh = u(ks[3], (4 * hidden_dim,))
    w_fc = u(ks[4], (output_dim, hidden_dim))        # PyTorch fc.weight
    b_fc = u(ks[5], (output_dim,))

    # Fused, pre-transposed layouts: 4H gate axis is the lane dimension.
    return {
        "wih": jnp.transpose(w_ih),                       # (D, 4H)
        "whh": jnp.transpose(w_hh),                       # (H, 4H)
        "b": (b_ih + b_hh).reshape(1, 4 * hidden_dim),    # (1, 4H)
        "wfc": jnp.transpose(w_fc),                       # (H, O)
        "bfc": b_fc.reshape(1, output_dim),               # (1, O)
    }


def reference_forward(x, params):
    """Pure-JAX reference matching PyTorch LSTM -> Linear -> tanh semantics."""
    B, T, D = x.shape
    H4 = params["whh"].shape[1]
    H = H4 // 4
    wih, whh = params["wih"], params["whh"]
    b = params["b"][0]

    def step(carry, x_t):
        h, c = carry
        z = x_t @ wih + h @ whh + b                      # (B, 4H)
        i = jax.nn.sigmoid(z[:, 0:H])
        f = jax.nn.sigmoid(z[:, H:2 * H])
        g = jnp.tanh(z[:, 2 * H:3 * H])
        o = jax.nn.sigmoid(z[:, 3 * H:4 * H])
        c = f * c + i * g
        h = o * jnp.tanh(c)
        return (h, c), h

    h0 = jnp.zeros((B, H), jnp.float32)
    c0 = jnp.zeros((B, H), jnp.float32)
    _, hs = jax.lax.scan(step, (h0, c0), jnp.transpose(x, (1, 0, 2)))
    hs = jnp.transpose(hs, (1, 0, 2))                    # (B, T, H)
    return jnp.tanh(hs @ params["wfc"] + params["bfc"])


if __name__ == "__main__":
    # Small shapes consistent with the module: batch=2, seq=8, input_dim=2, hidden=32.
    B, T, INPUT_DIM, HIDDEN_DIM, OUTPUT_DIM = 2, 8, 2, 32, 2

    key = jax.random.PRNGKey(0)
    kx, kp = jax.random.split(key)
    x = jax.random.normal(kx, (B, T, INPUT_DIM), dtype=jnp.float32)
    params = init_params(kp, INPUT_DIM, HIDDEN_DIM, OUTPUT_DIM)

    fwd = jax.jit(doa_model_mtm_forward)
    out = jax.block_until_ready(fwd(x, params))

    ref = jax.block_until_ready(reference_forward(x, params))
    assert out.shape == (B, T, OUTPUT_DIM)
    assert jnp.max(jnp.abs(out - ref)) < 1e-4

    print("KERNEL_OK")
</pallas_src>

<mosaic_0001>
module attributes {stable_mosaic.version = 11 : i64} {
  func.func @lstm_mtm_kernel(%arg0: memref<16x2xf32, #tpu.memory_space<vmem>>, %arg1: memref<2x128xf32, #tpu.memory_space<vmem>>, %arg2: memref<32x128xf32, #tpu.memory_space<vmem>>, %arg3: memref<1x128xf32, #tpu.memory_space<vmem>>, %arg4: memref<32x2xf32, #tpu.memory_space<vmem>>, %arg5: memref<1x2xf32, #tpu.memory_space<vmem>>, %arg6: memref<16x2xf32, #tpu.memory_space<vmem>>) attributes {dimension_semantics = [], scalar_prefetch = 0 : i64, scratch_operands = 0 : i64, tpu.core_type = #tpu.core_type<tc>} {
    %c0 = arith.constant 0 : index
    %c0_0 = arith.constant 0 : index
    %0 = vector.load %arg0[%c0, %c0_0] : memref<16x2xf32, #tpu.memory_space<vmem>>, vector<16x2xf32>
    %c0_1 = arith.constant 0 : index
    %c0_2 = arith.constant 0 : index
    %1 = vector.load %arg1[%c0_1, %c0_2] : memref<2x128xf32, #tpu.memory_space<vmem>>, vector<2x128xf32>
    %cst = arith.constant dense<0.000000e+00> : vector<16x128xf32>
    %2 = tpu.matmul %0, %1, %cst {dimension_numbers = #tpu.dot_dimension_numbers<[1], [0], [0], [1], [0, 0, 1, 1], [], []>} : vector<16x2xf32>, vector<2x128xf32>, vector<16x128xf32> -> vector<16x128xf32>
    %c0_3 = arith.constant 0 : index
    %c0_4 = arith.constant 0 : index
    %3 = vector.load %arg3[%c0_3, %c0_4] : memref<1x128xf32, #tpu.memory_space<vmem>>, vector<1x128xf32>
    %4 = vector.broadcast %3 : vector<1x128xf32> to vector<16x128xf32>
    %5 = arith.addf %2, %4 : vector<16x128xf32>
    %c0_5 = arith.constant 0 : index
    %c0_6 = arith.constant 0 : index
    %6 = vector.load %arg2[%c0_5, %c0_6] : memref<32x128xf32, #tpu.memory_space<vmem>>, vector<32x128xf32>
    %7 = tpu.iota {dimensions = array<i32: 1>} : vector<1x128xi32>
    %c64_i32 = arith.constant 64 : i32
    %8 = vector.broadcast %c64_i32 : i32 to vector<1x128xi32>
    %9 = arith.cmpi sge, %7, %8 : vector<1x128xi32>
    %c96_i32 = arith.constant 96 : i32
    %10 = vector.broadcast %c96_i32 : i32 to vector<1x128xi32>
    %11 = arith.cmpi slt, %7, %10 : vector<1x128xi32>
    %12 = arith.andi %9, %11 : vector<1x128xi1>
    %cst_7 = arith.constant 1.000000e+00 : f32
    %cst_8 = arith.constant 5.000000e-01 : f32
    %13 = vector.broadcast %cst_7 : f32 to vector<1x128xf32>
    %14 = vector.broadcast %cst_8 : f32 to vector<1x128xf32>
    %15 = arith.select %12, %13, %14 : vector<1x128xi1>, vector<1x128xf32>
    %cst_9 = arith.constant 0.000000e+00 : f32
    %cst_10 = arith.constant 5.000000e-01 : f32
    %16 = vector.broadcast %cst_9 : f32 to vector<1x128xf32>
    %17 = vector.broadcast %cst_10 : f32 to vector<1x128xf32>
    %18 = arith.select %12, %16, %17 : vector<1x128xi1>, vector<1x128xf32>
    %cst_11 = arith.constant 0.000000e+00 : f32
    %19 = vector.broadcast %cst_11 : f32 to vector<2x32xf32>
    %cst_12 = arith.constant 0.000000e+00 : f32
    %20 = vector.broadcast %cst_12 : f32 to vector<2x32xf32>
    %cst_13 = arith.constant dense<0.000000e+00> : vector<2x128xf32>
    %21 = tpu.matmul %19, %6, %cst_13 {dimension_numbers = #tpu.dot_dimension_numbers<[1], [0], [0], [1], [0, 0, 1, 1], [], []>} : vector<2x32xf32>, vector<32x128xf32>, vector<2x128xf32> -> vector<2x128xf32>
    %22 = vector.extract_strided_slice %5 {offsets = [0, 0], sizes = [2, 128], strides = [1, 1]} : vector<16x128xf32> to vector<2x128xf32>
    %23 = arith.addf %21, %22 : vector<2x128xf32>
    %24 = vector.broadcast %15 : vector<1x128xf32> to vector<2x128xf32>
    %25 = arith.mulf %24, %23 : vector<2x128xf32>
    %26 = math.tanh %25 : vector<2x128xf32>
    %27 = vector.broadcast %15 : vector<1x128xf32> to vector<2x128xf32>
    %28 = arith.mulf %27, %26 : vector<2x128xf32>
    %29 = vector.broadcast %18 : vector<1x128xf32> to vector<2x128xf32>
    %30 = arith.addf %28, %29 : vector<2x128xf32>
    %31 = vector.extract_strided_slice %30 {offsets = [0, 0], sizes = [2, 32], strides = [1, 1]} : vector<2x128xf32> to vector<2x32xf32>
    %32 = vector.extract_strided_slice %30 {offsets = [0, 32], sizes = [2, 32], strides = [1, 1]} : vector<2x128xf32> to vector<2x32xf32>
    %33 = vector.extract_strided_slice %30 {offsets = [0, 64], sizes = [2, 32], strides = [1, 1]} : vector<2x128xf32> to vector<2x32xf32>
    %34 = vector.extract_strided_slice %30 {offsets = [0, 96], sizes = [2, 32], strides = [1, 1]} : vector<2x128xf32> to vector<2x32xf32>
    %35 = arith.mulf %32, %20 : vector<2x32xf32>
    %36 = arith.mulf %31, %33 : vector<2x32xf32>
    %37 = arith.addf %35, %36 : vector<2x32xf32>
    %38 = math.tanh %37 : vector<2x32xf32>
    %39 = arith.mulf %34, %38 : vector<2x32xf32>
    %cst_14 = arith.constant dense<0.000000e+00> : vector<2x128xf32>
    %40 = tpu.matmul %39, %6, %cst_14 {dimension_numbers = #tpu.dot_dimension_numbers<[1], [0], [0], [1], [0, 0, 1, 1], [], []>} : vector<2x32xf32>, vector<32x128xf32>, vector<2x128xf32> -> vector<2x128xf32>
    %41 = vector.extract_strided_slice %5 {offsets = [2, 0], sizes = [2, 128], strides = [1, 1]} : vector<16x128xf32> to vector<2x128xf32>
    %42 = arith.addf %40, %41 : vector<2x128xf32>
    %43 = vector.broadcast %15 : vector<1x128xf32> to vector<2x128xf32>
    %44 = arith.mulf %43, %42 : vector<2x128xf32>
    %45 = math.tanh %44 : vector<2x128xf32>
    %46 = vector.broadcast %15 : vector<1x128xf32> to vector<2x128xf32>
    %47 = arith.mulf %46, %45 : vector<2x128xf32>
    %48 = vector.broadcast %18 : vector<1x128xf32> to vector<2x128xf32>
    %49 = arith.addf %47, %48 : vector<2x128xf32>
    %50 = vector.extract_strided_slice %49 {offsets = [0, 0], sizes = [2, 32], strides = [1, 1]} : vector<2x128xf32> to vector<2x32xf32>
    %51 = vector.extract_strided_slice %49 {offsets = [0, 32], sizes = [2, 32], strides = [1, 1]} : vector<2x128xf32> to vector<2x32xf32>
    %52 = vector.extract_strided_slice %49 {offsets = [0, 64], sizes = [2, 32], strides = [1, 1]} : vector<2x128xf32> to vector<2x32xf32>
    %53 = vector.extract_strided_slice %49 {offsets = [0, 96], sizes = [2, 32], strides = [1, 1]} : vector<2x128xf32> to vector<2x32xf32>
    %54 = arith.mulf %51, %37 : vector<2x32xf32>
    %55 = arith.mulf %50, %52 : vector<2x32xf32>
    %56 = arith.addf %54, %55 : vector<2x32xf32>
    %57 = math.tanh %56 : vector<2x32xf32>
    %58 = arith.mulf %53, %57 : vector<2x32xf32>
    %cst_15 = arith.constant dense<0.000000e+00> : vector<2x128xf32>
    %59 = tpu.matmul %58, %6, %cst_15 {dimension_numbers = #tpu.dot_dimension_numbers<[1], [0], [0], [1], [0, 0, 1, 1], [], []>} : vector<2x32xf32>, vector<32x128xf32>, vector<2x128xf32> -> vector<2x128xf32>
    %60 = vector.extract_strided_slice %5 {offsets = [4, 0], sizes = [2, 128], strides = [1, 1]} : vector<16x128xf32> to vector<2x128xf32>
    %61 = arith.addf %59, %60 : vector<2x128xf32>
    %62 = vector.broadcast %15 : vector<1x128xf32> to vector<2x128xf32>
    %63 = arith.mulf %62, %61 : vector<2x128xf32>
    %64 = math.tanh %63 : vector<2x128xf32>
    %65 = vector.broadcast %15 : vector<1x128xf32> to vector<2x128xf32>
    %66 = arith.mulf %65, %64 : vector<2x128xf32>
    %67 = vector.broadcast %18 : vector<1x128xf32> to vector<2x128xf32>
    %68 = arith.addf %66, %67 : vector<2x128xf32>
    %69 = vector.extract_strided_slice %68 {offsets = [0, 0], sizes = [2, 32], strides = [1, 1]} : vector<2x128xf32> to vector<2x32xf32>
    %70 = vector.extract_strided_slice %68 {offsets = [0, 32], sizes = [2, 32], strides = [1, 1]} : vector<2x128xf32> to vector<2x32xf32>
    %71 = vector.extract_strided_slice %68 {offsets = [0, 64], sizes = [2, 32], strides = [1, 1]} : vector<2x128xf32> to vector<2x32xf32>
    %72 = vector.extract_strided_slice %68 {offsets = [0, 96], sizes = [2, 32], strides = [1, 1]} : vector<2x128xf32> to vector<2x32xf32>
    %73 = arith.mulf %70, %56 : vector<2x32xf32>
    %74 = arith.mulf %69, %71 : vector<2x32xf32>
    %75 = arith.addf %73, %74 : vector<2x32xf32>
    %76 = math.tanh %75 : vector<2x32xf32>
    %77 = arith.mulf %72, %76 : vector<2x32xf32>
    %cst_16 = arith.constant dense<0.000000e+00> : vector<2x128xf32>
    %78 = tpu.matmul %77, %6, %cst_16 {dimension_numbers = #tpu.dot_dimension_numbers<[1], [0], [0], [1], [0, 0, 1, 1], [], []>} : vector<2x32xf32>, vector<32x128xf32>, vector<2x128xf32> -> vector<2x128xf32>
    %79 = vector.extract_strided_slice %5 {offsets = [6, 0], sizes = [2, 128], strides = [1, 1]} : vector<16x128xf32> to vector<2x128xf32>
    %80 = arith.addf %78, %79 : vector<2x128xf32>
    %81 = vector.broadcast %15 : vector<1x128xf32> to vector<2x128xf32>
    %82 = arith.mulf %81, %80 : vector<2x128xf32>
    %83 = math.tanh %82 : vector<2x128xf32>
    %84 = vector.broadcast %15 : vector<1x128xf32> to vector<2x128xf32>
    %85 = arith.mulf %84, %83 : vector<2x128xf32>
    %86 = vector.broadcast %18 : vector<1x128xf32> to vector<2x128xf32>
    %87 = arith.addf %85, %86 : vector<2x128xf32>
    %88 = vector.extract_strided_slice %87 {offsets = [0, 0], sizes = [2, 32], strides = [1, 1]} : vector<2x128xf32> to vector<2x32xf32>
    %89 = vector.extract_strided_slice %87 {offsets = [0, 32], sizes = [2, 32], strides = [1, 1]} : vector<2x128xf32> to vector<2x32xf32>
    %90 = vector.extract_strided_slice %87 {offsets = [0, 64], sizes = [2, 32], strides = [1, 1]} : vector<2x128xf32> to vector<2x32xf32>
    %91 = vector.extract_strided_slice %87 {offsets = [0, 96], sizes = [2, 32], strides = [1, 1]} : vector<2x128xf32> to vector<2x32xf32>
    %92 = arith.mulf %89, %75 : vector<2x32xf32>
    %93 = arith.mulf %88, %90 : vector<2x32xf32>
    %94 = arith.addf %92, %93 : vector<2x32xf32>
    %95 = math.tanh %94 : vector<2x32xf32>
    %96 = arith.mulf %91, %95 : vector<2x32xf32>
    %cst_17 = arith.constant dense<0.000000e+00> : vector<2x128xf32>
    %97 = tpu.matmul %96, %6, %cst_17 {dimension_numbers = #tpu.dot_dimension_numbers<[1], [0], [0], [1], [0, 0, 1, 1], [], []>} : vector<2x32xf32>, vector<32x128xf32>, vector<2x128xf32> -> vector<2x128xf32>
    %98 = vector.extract_strided_slice %5 {offsets = [8, 0], sizes = [2, 128], strides = [1, 1]} : vector<16x128xf32> to vector<2x128xf32>
    %99 = arith.addf %97, %98 : vector<2x128xf32>
    %100 = vector.broadcast %15 : vector<1x128xf32> to vector<2x128xf32>
    %101 = arith.mulf %100, %99 : vector<2x128xf32>
    %102 = math.tanh %101 : vector<2x128xf32>
    %103 = vector.broadcast %15 : vector<1x128xf32> to vector<2x128xf32>
    %104 = arith.mulf %103, %102 : vector<2x128xf32>
    %105 = vector.broadcast %18 : vector<1x128xf32> to vector<2x128xf32>
    %106 = arith.addf %104, %105 : vector<2x128xf32>
    %107 = vector.extract_strided_slice %106 {offsets = [0, 0], sizes = [2, 32], strides = [1, 1]} : vector<2x128xf32> to vector<2x32xf32>
    %108 = vector.extract_strided_slice %106 {offsets = [0, 32], sizes = [2, 32], strides = [1, 1]} : vector<2x128xf32> to vector<2x32xf32>
    %109 = vector.extract_strided_slice %106 {offsets = [0, 64], sizes = [2, 32], strides = [1, 1]} : vector<2x128xf32> to vector<2x32xf32>
    %110 = vector.extract_strided_slice %106 {offsets = [0, 96], sizes = [2, 32], strides = [1, 1]} : vector<2x128xf32> to vector<2x32xf32>
    %111 = arith.mulf %108, %94 : vector<2x32xf32>
    %112 = arith.mulf %107, %109 : vector<2x32xf32>
    %113 = arith.addf %111, %112 : vector<2x32xf32>
    %114 = math.tanh %113 : vector<2x32xf32>
    %115 = arith.mulf %110, %114 : vector<2x32xf32>
    %cst_18 = arith.constant dense<0.000000e+00> : vector<2x128xf32>
    %116 = tpu.matmul %115, %6, %cst_18 {dimension_numbers = #tpu.dot_dimension_numbers<[1], [0], [0], [1], [0, 0, 1, 1], [], []>} : vector<2x32xf32>, vector<32x128xf32>, vector<2x128xf32> -> vector<2x128xf32>
    %117 = vector.extract_strided_slice %5 {offsets = [10, 0], sizes = [2, 128], strides = [1, 1]} : vector<16x128xf32> to vector<2x128xf32>
    %118 = arith.addf %116, %117 : vector<2x128xf32>
    %119 = vector.broadcast %15 : vector<1x128xf32> to vector<2x128xf32>
    %120 = arith.mulf %119, %118 : vector<2x128xf32>
    %121 = math.tanh %120 : vector<2x128xf32>
    %122 = vector.broadcast %15 : vector<1x128xf32> to vector<2x128xf32>
    %123 = arith.mulf %122, %121 : vector<2x128xf32>
    %124 = vector.broadcast %18 : vector<1x128xf32> to vector<2x128xf32>
    %125 = arith.addf %123, %124 : vector<2x128xf32>
    %126 = vector.extract_strided_slice %125 {offsets = [0, 0], sizes = [2, 32], strides = [1, 1]} : vector<2x128xf32> to vector<2x32xf32>
    %127 = vector.extract_strided_slice %125 {offsets = [0, 32], sizes = [2, 32], strides = [1, 1]} : vector<2x128xf32> to vector<2x32xf32>
    %128 = vector.extract_strided_slice %125 {offsets = [0, 64], sizes = [2, 32], strides = [1, 1]} : vector<2x128xf32> to vector<2x32xf32>
    %129 = vector.extract_strided_slice %125 {offsets = [0, 96], sizes = [2, 32], strides = [1, 1]} : vector<2x128xf32> to vector<2x32xf32>
    %130 = arith.mulf %127, %113 : vector<2x32xf32>
    %131 = arith.mulf %126, %128 : vector<2x32xf32>
    %132 = arith.addf %130, %131 : vector<2x32xf32>
    %133 = math.tanh %132 : vector<2x32xf32>
    %134 = arith.mulf %129, %133 : vector<2x32xf32>
    %cst_19 = arith.constant dense<0.000000e+00> : vector<2x128xf32>
    %135 = tpu.matmul %134, %6, %cst_19 {dimension_numbers = #tpu.dot_dimension_numbers<[1], [0], [0], [1], [0, 0, 1, 1], [], []>} : vector<2x32xf32>, vector<32x128xf32>, vector<2x128xf32> -> vector<2x128xf32>
    %136 = vector.extract_strided_slice %5 {offsets = [12, 0], sizes = [2, 128], strides = [1, 1]} : vector<16x128xf32> to vector<2x128xf32>
    %137 = arith.addf %135, %136 : vector<2x128xf32>
    %138 = vector.broadcast %15 : vector<1x128xf32> to vector<2x128xf32>
    %139 = arith.mulf %138, %137 : vector<2x128xf32>
    %140 = math.tanh %139 : vector<2x128xf32>
    %141 = vector.broadcast %15 : vector<1x128xf32> to vector<2x128xf32>
    %142 = arith.mulf %141, %140 : vector<2x128xf32>
    %143 = vector.broadcast %18 : vector<1x128xf32> to vector<2x128xf32>
    %144 = arith.addf %142, %143 : vector<2x128xf32>
    %145 = vector.extract_strided_slice %144 {offsets = [0, 0], sizes = [2, 32], strides = [1, 1]} : vector<2x128xf32> to vector<2x32xf32>
    %146 = vector.extract_strided_slice %144 {offsets = [0, 32], sizes = [2, 32], strides = [1, 1]} : vector<2x128xf32> to vector<2x32xf32>
    %147 = vector.extract_strided_slice %144 {offsets = [0, 64], sizes = [2, 32], strides = [1, 1]} : vector<2x128xf32> to vector<2x32xf32>
    %148 = vector.extract_strided_slice %144 {offsets = [0, 96], sizes = [2, 32], strides = [1, 1]} : vector<2x128xf32> to vector<2x32xf32>
    %149 = arith.mulf %146, %132 : vector<2x32xf32>
    %150 = arith.mulf %145, %147 : vector<2x32xf32>
    %151 = arith.addf %149, %150 : vector<2x32xf32>
    %152 = math.tanh %151 : vector<2x32xf32>
    %153 = arith.mulf %148, %152 : vector<2x32xf32>
    %cst_20 = arith.constant dense<0.000000e+00> : vector<2x128xf32>
    %154 = tpu.matmul %153, %6, %cst_20 {dimension_numbers = #tpu.dot_dimension_numbers<[1], [0], [0], [1], [0, 0, 1, 1], [], []>} : vector<2x32xf32>, vector<32x128xf32>, vector<2x128xf32> -> vector<2x128xf32>
    %155 = vector.extract_strided_slice %5 {offsets = [14, 0], sizes = [2, 128], strides = [1, 1]} : vector<16x128xf32> to vector<2x128xf32>
    %156 = arith.addf %154, %155 : vector<2x128xf32>
    %157 = vector.broadcast %15 : vector<1x128xf32> to vector<2x128xf32>
    %158 = arith.mulf %157, %156 : vector<2x128xf32>
    %159 = math.tanh %158 : vector<2x128xf32>
    %160 = vector.broadcast %15 : vector<1x128xf32> to vector<2x128xf32>
    %161 = arith.mulf %160, %159 : vector<2x128xf32>
    %162 = vector.broadcast %18 : vector<1x128xf32> to vector<2x128xf32>
    %163 = arith.addf %161, %162 : vector<2x128xf32>
    %164 = vector.extract_strided_slice %163 {offsets = [0, 0], sizes = [2, 32], strides = [1, 1]} : vector<2x128xf32> to vector<2x32xf32>
    %165 = vector.extract_strided_slice %163 {offsets = [0, 32], sizes = [2, 32], strides = [1, 1]} : vector<2x128xf32> to vector<2x32xf32>
    %166 = vector.extract_strided_slice %163 {offsets = [0, 64], sizes = [2, 32], strides = [1, 1]} : vector<2x128xf32> to vector<2x32xf32>
    %167 = vector.extract_strided_slice %163 {offsets = [0, 96], sizes = [2, 32], strides = [1, 1]} : vector<2x128xf32> to vector<2x32xf32>
    %168 = arith.mulf %165, %151 : vector<2x32xf32>
    %169 = arith.mulf %164, %166 : vector<2x32xf32>
    %170 = arith.addf %168, %169 : vector<2x32xf32>
    %171 = math.tanh %170 : vector<2x32xf32>
    %172 = arith.mulf %167, %171 : vector<2x32xf32>
    %173 = tpu.concatenate %39, %58, %77, %96, %115, %134, %153, %172 in 0 : vector<2x32xf32>, vector<2x32xf32>, vector<2x32xf32>, vector<2x32xf32>, vector<2x32xf32>, vector<2x32xf32>, vector<2x32xf32>, vector<2x32xf32> -> vector<16x32xf32>
    %c0_21 = arith.constant 0 : index
    %c0_22 = arith.constant 0 : index
    %174 = vector.load %arg4[%c0_21, %c0_22] : memref<32x2xf32, #tpu.memory_space<vmem>>, vector<32x2xf32>
    %cst_23 = arith.constant dense<0.000000e+00> : vector<16x2xf32>
    %175 = tpu.matmul %173, %174, %cst_23 {dimension_numbers = #tpu.dot_dimension_numbers<[1], [0], [0], [1], [0, 0, 1, 1], [], []>} : vector<16x32xf32>, vector<32x2xf32>, vector<16x2xf32> -> vector<16x2xf32>
    %c0_24 = arith.constant 0 : index
    %c0_25 = arith.constant 0 : index
    %176 = vector.load %arg5[%c0_24, %c0_25] : memref<1x2xf32, #tpu.memory_space<vmem>>, vector<1x2xf32>
    %177 = vector.broadcast %176 : vector<1x2xf32> to vector<16x2xf32>
    %178 = arith.addf %175, %177 : vector<16x2xf32>
    %179 = math.tanh %178 : vector<16x2xf32>
    %c0_26 = arith.constant 0 : index
    %c0_27 = arith.constant 0 : index
    %180 = vector.load %arg6[%c0_26, %c0_27] : memref<16x2xf32, #tpu.memory_space<vmem>>, vector<16x2xf32>
    tpu.vector_store %arg6[%c0_26, %c0_27], %179 {strides = array<i32>} : memref<16x2xf32, #tpu.memory_space<vmem>>, vector<16x2xf32>,
    return
  }
}

</mosaic_0001>

<llo_original>
// kernel: doa_model_mtm_forward.1
$region0: #{doa_model_mtm_forward.1}
  #allocation0 [shape = 'u32[]', space=smem, size = 0x4, offset = 0x4, fixed_abs, tag = 'smem constant byte address 0x4 - core index']
  #allocation1 [shape = 'u32[144,128]{1,0:T(1,128)}', space=vmem, size = 0x12000, scoped, tag = 'internal scratch']
  %s0 = inlined_call_operand.vmem [shape: f32[16,2], index: 0, kind: input, shape index: {}]
  %s1 = inlined_call_operand.vmem [shape: f32[2,128], index: 1, kind: input, shape index: {}]
  %s2 = inlined_call_operand.vmem [shape: f32[32,128], index: 2, kind: input, shape index: {}]
  %s3 = inlined_call_operand.vmem [shape: f32[1,128], index: 3, kind: input, shape index: {}]
  %s4 = inlined_call_operand.vmem [shape: f32[32,2], index: 4, kind: input, shape index: {}]
  %s5 = inlined_call_operand.vmem [shape: f32[1,2], index: 5, kind: input, shape index: {}]
  %s6 = inlined_call_operand.vmem [shape: f32[16,2], index: 6, kind: output, shape index: {}]
  %s7 = sld [smem:[#allocation0]]
  $region34: #{doa_model_mtm_forward.1} parent=0
    _
  %s9 = ssub.s32 1, %s7
  %s10 = scalar_select 0, %s9, %s7
  // Predicated region
  $region2: #{doa_model_mtm_forward.1} parent=0 // pred_check
    _
  $region3: #{doa_model_mtm_forward.1} parent=0 // pred_check_branch
    %12 = sbr.rel (0) target = $region5
  $region4: #{doa_model_mtm_forward.1} parent=0 // pred_region
    _
  $region5: #{doa_model_mtm_forward.1} parent=0 // pred_fallthru
    _
  // Predicated region
  $region6: #{doa_model_mtm_forward.1} parent=0 // pred_check
    _
  $region7: #{doa_model_mtm_forward.1} parent=0 // pred_check_branch
    %14 = sbr.rel (0) target = $region9
  $region8: #{doa_model_mtm_forward.1} parent=0 // pred_region
    _
  $region9: #{doa_model_mtm_forward.1} parent=0 // pred_fallthru
    _
  // Predicated region
  $region10: #{doa_model_mtm_forward.1} parent=0 // pred_check
    _
  $region11: #{doa_model_mtm_forward.1} parent=0 // pred_check_branch
    %16 = sbr.rel (0) target = $region13
  $region12: #{doa_model_mtm_forward.1} parent=0 // pred_region
    _
  $region13: #{doa_model_mtm_forward.1} parent=0 // pred_fallthru
    _
  // Predicated region
  $region14: #{doa_model_mtm_forward.1} parent=0 // pred_check
    _
  $region15: #{doa_model_mtm_forward.1} parent=0 // pred_check_branch
    %18 = sbr.rel (0) target = $region17
  $region16: #{doa_model_mtm_forward.1} parent=0 // pred_region
    _
  $region17: #{doa_model_mtm_forward.1} parent=0 // pred_fallthru
    _
  // Predicated region
  $region18: #{doa_model_mtm_forward.1} parent=0 // pred_check
    _
  $region19: #{doa_model_mtm_forward.1} parent=0 // pred_check_branch
    %20 = sbr.rel (0) target = $region21
  $region20: #{doa_model_mtm_forward.1} parent=0 // pred_region
    _
  $region21: #{doa_model_mtm_forward.1} parent=0 // pred_fallthru
    _
  // Predicated region
  $region22: #{doa_model_mtm_forward.1} parent=0 // pred_check
    _
  $region23: #{doa_model_mtm_forward.1} parent=0 // pred_check_branch
    %22 = sbr.rel (0) target = $region25
  $region24: #{doa_model_mtm_forward.1} parent=0 // pred_region
    _
  $region25: #{doa_model_mtm_forward.1} parent=0 // pred_fallthru
    _
  %v23 = vld [vmem:[%s0] sm:$0xff]
  %v24 = vld [vmem:[%s0 + $0x8] sm:$0xff]
  %v25 = vld [vmem:[%s1] sm:$0x3]
  %v26 = vld [vmem:[%s3] sm:$0x1]
  %v28 = vlaneseq
  %v29 = vshrl.u32 %v28, 7
  %v30 = vsub.s32 0, %v29
  %v31 = vrot.slane %v26, %v30
  %vm33 = vcmask 15360
  %v35 = vsel %vm33, %v23, 0
  %v38 = vsel %vm33, %v24, 0
  %vm40 = vcmask 1041408
  %v42 = vsel %vm40, %v25, 0
  %44 = vmatprep.subr.mxu0 0.0
  %45 = vmatpush1.msra.mxu0 %v42
  %46 = vmatprep.subr.mxu0 0.0
  %47 = vmatpush1.msra.mxu0 0.0
  %48 = vmatprep.subr.mxu0 0.0
  %49 = vmatpush1.msra.mxu0 0.0
  %50 = vmatprep.subr.mxu0 0.0
  %51 = vmatpush1.msra.mxu0 0.0
  %52 = vmatprep.subr.mxu0 0.0
  %53 = vmatpush1.msra.mxu0 0.0
  %54 = vmatprep.subr.mxu0 0.0
  %55 = vmatpush1.msra.mxu0 0.0
  %56 = vmatprep.subr.mxu0 0.0
  %57 = vmatpush1.msra.mxu0 0.0
  %58 = vmatprep.subr.mxu0 0.0
  %59 = vmatpush1.msra.mxu0 0.0
  %60 = vmatprep.subr.mxu0 0.0
  %61 = vmatpush1.msra.mxu0 0.0
  %62 = vmatprep.subr.mxu0 0.0
  %63 = vmatpush1.msra.mxu0 0.0
  %64 = vmatprep.subr.mxu0 0.0
  %65 = vmatpush1.msra.mxu0 0.0
  %66 = vmatprep.subr.mxu0 0.0
  %67 = vmatpush1.msra.mxu0 0.0
  %68 = vmatprep.subr.mxu0 0.0
  %69 = vmatpush1.msra.mxu0 0.0
  %70 = vmatprep.subr.mxu0 0.0
  %71 = vmatpush1.msra.mxu0 0.0
  %72 = vmatprep.subr.mxu0 0.0
  %73 = vmatpush1.msra.mxu0 0.0
  %74 = vmatprep.subr.mxu0 0.0
  %75 = vmatpush1.msra.mxu0 0.0
  %76 = vmatprep.subr.mxu0 0.0
  %77 = vmatpush1.msra.mxu0 0.0
  %78 = vmatprep.subr.mxu0 0.0
  %79 = vmatpush1.msra.mxu0 0.0
  %80 = vmatprep.subr.mxu0 0.0
  %81 = vmatpush1.msra.mxu0 0.0
  %82 = vmatprep.subr.mxu0 0.0
  %83 = vmatpush1.msra.mxu0 0.0
  %84 = vmatprep.subr.mxu0 0.0
  %85 = vmatpush1.msra.mxu0 0.0
  %86 = vmatprep.subr.mxu0 0.0
  %87 = vmatpush1.msra.mxu0 0.0
  %88 = vmatprep.subr.mxu0 0.0
  %89 = vmatpush1.msra.mxu0 0.0
  %90 = vmatprep.subr.mxu0 0.0
  %91 = vmatpush1.msra.mxu0 0.0
  %92 = vmatprep.subr.mxu0 0.0
  %93 = vmatpush1.msra.mxu0 0.0
  %94 = vmatprep.subr.mxu0 0.0
  %95 = vmatpush1.msra.mxu0 0.0
  %96 = vmatprep.subr.mxu0 0.0
  %97 = vmatpush1.msra.mxu0 0.0
  %98 = vmatprep.subr.mxu0 0.0
  %99 = vmatpush1.msra.mxu0 0.0
  %100 = vmatprep.subr.mxu0 0.0
  %101 = vmatpush1.msra.mxu0 0.0
  %102 = vmatprep.subr.mxu0 0.0
  %103 = vmatpush1.msra.mxu0 0.0
  %104 = vmatprep.subr.mxu0 0.0
  %105 = vmatpush1.msra.mxu0 0.0
  %106 = vmatprep.subr.mxu0 0.0
  %107 = vmatpush1.msra.mxu0 0.0
  %108 = vmatprep.mubr.f32.mxu0 0.0
  %109 = vmatmul.mubr.f32.gmra.mrb[0].mxu0 %v35
  %v110 = vpop.f32.mrb[0].mxu0
  %v111 = vadd.f32 %v31, %v110
  %v112 = vpop.f32.mrb[0].mxu0
  %113 = vmatprep.mubr.f32.mxu0 0.0
  %114 = vmatmul.mubr.f32.gmra.mrb[0].mxu0 %v38
  %v115 = vpop.f32.mrb[0].mxu0
  %v116 = vadd.f32 %v31, %v115
  %v117 = vpop.f32.mrb[0].mxu0
  %118 = vdwg.mxu0
  %v119 = vld [vmem:[%s2] sm:$0xff]
  %v120 = vld [vmem:[%s2 + $0x8] sm:$0xff]
  %v121 = vld [vmem:[%s2 + $0x10] sm:$0xff]
  %v122 = vld [vmem:[%s2 + $0x18] sm:$0xff]
  %v123 = vlaneseq
  %v124 = vand.u32 %v123, 127
  %vm125 = vcmp.ge.s32.totalorder %v124, 64
  %vm126 = vcmp.lt.s32.totalorder %v124, 96
  %vm127 = vmand %vm125, %vm126
  %v128 = vsel %vm127, 1.0, 0.5
  %v129 = vsel %vm127, 0.0, 0.5
  %vm130 = vcmask 261120
  %v132 = vsel %vm130, 0.0, 0
  %134 = vmatprep.subr.mxu0 0.0
  %135 = vmatpush1.msra.mxu0 %v119
  %136 = vmatprep.subr.mxu0 0.0
  %137 = vmatpush1.msra.mxu0 %v120
  %138 = vmatprep.subr.mxu0 0.0
  %139 = vmatpush1.msra.mxu0 %v121
  %140 = vmatprep.subr.mxu0 0.0
  %141 = vmatpush1.msra.mxu0 %v122
  %142 = vmatprep.subr.mxu0 0.0
  %143 = vmatpush1.msra.mxu0 0.0
  %144 = vmatprep.subr.mxu0 0.0
  %145 = vmatpush1.msra.mxu0 0.0
  %146 = vmatprep.subr.mxu0 0.0
  %147 = vmatpush1.msra.mxu0 0.0
  %148 = vmatprep.subr.mxu0 0.0
  %149 = vmatpush1.msra.mxu0 0.0
  %150 = vmatprep.subr.mxu0 0.0
  %151 = vmatpush1.msra.mxu0 0.0
  %152 = vmatprep.subr.mxu0 0.0
  %153 = vmatpush1.msra.mxu0 0.0
  %154 = vmatprep.subr.mxu0 0.0
  %155 = vmatpush1.msra.mxu0 0.0
  %156 = vmatprep.subr.mxu0 0.0
  %157 = vmatpush1.msra.mxu0 0.0
  %158 = vmatprep.subr.mxu0 0.0
  %159 = vmatpush1.msra.mxu0 0.0
  %160 = vmatprep.subr.mxu0 0.0
  %161 = vmatpush1.msra.mxu0 0.0
  %162 = vmatprep.subr.mxu0 0.0
  %163 = vmatpush1.msra.mxu0 0.0
  %164 = vmatprep.subr.mxu0 0.0
  %165 = vmatpush1.msra.mxu0 0.0
  %166 = vmatprep.subr.mxu0 0.0
  %167 = vmatpush1.msra.mxu0 0.0
  %168 = vmatprep.subr.mxu0 0.0
  %169 = vmatpush1.msra.mxu0 0.0
  %170 = vmatprep.subr.mxu0 0.0
  %171 = vmatpush1.msra.mxu0 0.0
  %172 = vmatprep.subr.mxu0 0.0
  %173 = vmatpush1.msra.mxu0 0.0
  %174 = vmatprep.subr.mxu0 0.0
  %175 = vmatpush1.msra.mxu0 0.0
  %176 = vmatprep.subr.mxu0 0.0
  %177 = vmatpush1.msra.mxu0 0.0
  %178 = vmatprep.subr.mxu0 0.0
  %179 = vmatpush1.msra.mxu0 0.0
  %180 = vmatprep.subr.mxu0 0.0
  %181 = vmatpush1.msra.mxu0 0.0
  %182 = vmatprep.subr.mxu0 0.0
  %183 = vmatpush1.msra.mxu0 0.0
  %184 = vmatprep.subr.mxu0 0.0
  %185 = vmatpush1.msra.mxu0 0.0
  %186 = vmatprep.subr.mxu0 0.0
  %187 = vmatpush1.msra.mxu0 0.0
  %188 = vmatprep.subr.mxu0 0.0
  %189 = vmatpush1.msra.mxu0 0.0
  %190 = vmatprep.subr.mxu0 0.0
  %191 = vmatpush1.msra.mxu0 0.0
  %192 = vmatprep.subr.mxu0 0.0
  %193 = vmatpush1.msra.mxu0 0.0
  %194 = vmatprep.subr.mxu0 0.0
  %195 = vmatpush1.msra.mxu0 0.0
  %196 = vmatprep.subr.mxu0 0.0
  %197 = vmatpush1.msra.mxu0 0.0
  %198 = vmatprep.mubr.f32.mxu0 0.0
  %199 = vmatmul.mubr.f32.gmra.mrb[0].mxu0 %v132
  %v200 = vpop.f32.mrb[0].mxu0
  %v201 = vadd.f32 %v111, %v200
  %v202 = vpop.f32.mrb[0].mxu0
  %203 = vdwg.mxu0
  %v204 = vmul.f32 %v128, %v201
  %v205 = vtanh.pop %v204
  %v206 = vmul.f32 %v128, %v205
  %v207 = vadd.f32 %v206, %v129
  %v208 = vmul.f32 %v207, 0.0
  %210 = vrot.lane.b32.xlu0 %v207, 64
  %v211 = vpop.permute.xlu0 %210
  %v213 = vmul.f32 %v207, %v211
  %215 = vrot.lane.b32.xlu0 %v213, 32
  %v216 = vpop.permute.xlu0 %215
  %v218 = vadd.f32 %v208, %v216
  %v219 = vtanh.pop %v218
  %221 = vrot.lane.b32.xlu0 %v219, 64
  %v222 = vpop.permute.xlu0 %221
  %v224 = vmul.f32 %v207, %v222
  %226 = vrot.lane.b32.xlu0 %v224, 32
  %v227 = vpop.permute.xlu0 %226
  %v229 = vrot.slane %v111, 2
  %v231 = vsel %vm130, %v227, 0
  %233 = vmatprep.subr.mxu0 0.0
  %234 = vmatpush1.msra.mxu0 %v119
  %235 = vmatprep.subr.mxu0 0.0
  %236 = vmatpush1.msra.mxu0 %v120
  %237 = vmatprep.subr.mxu0 0.0
  %238 = vmatpush1.msra.mxu0 %v121
  %239 = vmatprep.subr.mxu0 0.0
  %240 = vmatpush1.msra.mxu0 %v122
  %241 = vmatprep.subr.mxu0 0.0
  %242 = vmatpush1.msra.mxu0 0.0
  %243 = vmatprep.subr.mxu0 0.0
  %244 = vmatpush1.msra.mxu0 0.0
  %245 = vmatprep.subr.mxu0 0.0
  %246 = vmatpush1.msra.mxu0 0.0
  %247 = vmatprep.subr.mxu0 0.0
  %248 = vmatpush1.msra.mxu0 0.0
  %249 = vmatprep.subr.mxu0 0.0
  %250 = vmatpush1.msra.mxu0 0.0
  %251 = vmatprep.subr.mxu0 0.0
  %252 = vmatpush1.msra.mxu0 0.0
  %253 = vmatprep.subr.mxu0 0.0
  %254 = vmatpush1.msra.mxu0 0.0
  %255 = vmatprep.subr.mxu0 0.0
  %256 = vmatpush1.msra.mxu0 0.0
  %257 = vmatprep.subr.mxu0 0.0
  %258 = vmatpush1.msra.mxu0 0.0
  %259 = vmatprep.subr.mxu0 0.0
  %260 = vmatpush1.msra.mxu0 0.0
  %261 = vmatprep.subr.mxu0 0.0
  %262 = vmatpush1.msra.mxu0 0.0
  %263 = vmatprep.subr.mxu0 0.0
  %264 = vmatpush1.msra.mxu0 0.0
  %265 = vmatprep.subr.mxu0 0.0
  %266 = vmatpush1.msra.mxu0 0.0
  %267 = vmatprep.subr.mxu0 0.0
  %268 = vmatpush1.msra.mxu0 0.0
  %269 = vmatprep.subr.mxu0 0.0
  %270 = vmatpush1.msra.mxu0 0.0
  %271 = vmatprep.subr.mxu0 0.0
  %272 = vmatpush1.msra.mxu0 0.0
  %273 = vmatprep.subr.mxu0 0.0
  %274 = vmatpush1.msra.mxu0 0.0
  %275 = vmatprep.subr.mxu0 0.0
  %276 = vmatpush1.msra.mxu0 0.0
  %277 = vmatprep.subr.mxu0 0.0
  %278 = vmatpush1.msra.mxu0 0.0
  %279 = vmatprep.subr.mxu0 0.0
  %280 = vmatpush1.msra.mxu0 0.0
  %281 = vmatprep.subr.mxu0 0.0
  %282 = vmatpush1.msra.mxu0 0.0
  %283 = vmatprep.subr.mxu0 0.0
  %284 = vmatpush1.msra.mxu0 0.0
  %285 = vmatprep.subr.mxu0 0.0
  %286 = vmatpush1.msra.mxu0 0.0
  %287 = vmatprep.subr.mxu0 0.0
  %288 = vmatpush1.msra.mxu0 0.0
  %289 = vmatprep.subr.mxu0 0.0
  %290 = vmatpush1.msra.mxu0 0.0
  %291 = vmatprep.subr.mxu0 0.0
  %292 = vmatpush1.msra.mxu0 0.0
  %293 = vmatprep.subr.mxu0 0.0
  %294 = vmatpush1.msra.mxu0 0.0
  %295 = vmatprep.subr.mxu0 0.0
  %296 = vmatpush1.msra.mxu0 0.0
  %297 = vmatprep.mubr.f32.mxu0 0.0
  %298 = vmatmul.mubr.f32.gmra.mrb[0].mxu0 %v231
  %v299 = vpop.f32.mrb[0].mxu0
  %v300 = vadd.f32 %v229, %v299
  %v301 = vpop.f32.mrb[0].mxu0
  %302 = vdwg.mxu0
  %v303 = vmul.f32 %v128, %v300
  %v304 = vtanh.pop %v303
  %v305 = vmul.f32 %v128, %v304
  %v306 = vadd.f32 %v305, %v129
  %v307 = vmul.f32 %v306, %v218
  %309 = vrot.lane.b32.xlu0 %v306, 64
  %v310 = vpop.permute.xlu0 %309
  %v312 = vmul.f32 %v306, %v310
  %314 = vrot.lane.b32.xlu0 %v312, 32
  %v315 = vpop.permute.xlu0 %314
  %v317 = vadd.f32 %v307, %v315
  %v318 = vtanh.pop %v317
  %320 = vrot.lane.b32.xlu0 %v318, 64
  %v321 = vpop.permute.xlu0 %320
  %v323 = vmul.f32 %v306, %v321
  %325 = vrot.lane.b32.xlu0 %v323, 32
  %v326 = vpop.permute.xlu0 %325
  %v327 = vrot.slane %v111, 4
  %v329 = vsel %vm130, %v326, 0
  %331 = vmatprep.subr.mxu0 0.0
  %332 = vmatpush1.msra.mxu0 %v119
  %333 = vmatprep.subr.mxu0 0.0
  %334 = vmatpush1.msra.mxu0 %v120
  %335 = vmatprep.subr.mxu0 0.0
  %336 = vmatpush1.msra.mxu0 %v121
  %337 = vmatprep.subr.mxu0 0.0
  %338 = vmatpush1.msra.mxu0 %v122
  %339 = vmatprep.subr.mxu0 0.0
  %340 = vmatpush1.msra.mxu0 0.0
  %341 = vmatprep.subr.mxu0 0.0
  %342 = vmatpush1.msra.mxu0 0.0
  %343 = vmatprep.subr.mxu0 0.0
  %344 = vmatpush1.msra.mxu0 0.0
  %345 = vmatprep.subr.mxu0 0.0
  %346 = vmatpush1.msra.mxu0 0.0
  %347 = vmatprep.subr.mxu0 0.0
  %348 = vmatpush1.msra.mxu0 0.0
  %349 = vmatprep.subr.mxu0 0.0
  %350 = vmatpush1.msra.mxu0 0.0
  %351 = vmatprep.subr.mxu0 0.0
  %352 = vmatpush1.msra.mxu0 0.0
  %353 = vmatprep.subr.mxu0 0.0
  %354 = vmatpush1.msra.mxu0 0.0
  %355 = vmatprep.subr.mxu0 0.0
  %356 = vmatpush1.msra.mxu0 0.0
  %357 = vmatprep.subr.mxu0 0.0
  %358 = vmatpush1.msra.mxu0 0.0
  %359 = vmatprep.subr.mxu0 0.0
  %360 = vmatpush1.msra.mxu0 0.0
  %361 = vmatprep.subr.mxu0 0.0
  %362 = vmatpush1.msra.mxu0 0.0
  %363 = vmatprep.subr.mxu0 0.0
  %364 = vmatpush1.msra.mxu0 0.0
  %365 = vmatprep.subr.mxu0 0.0
  %366 = vmatpush1.msra.mxu0 0.0
  %367 = vmatprep.subr.mxu0 0.0
  %368 = vmatpush1.msra.mxu0 0.0
  %369 = vmatprep.subr.mxu0 0.0
  %370 = vmatpush1.msra.mxu0 0.0
  %371 = vmatprep.subr.mxu0 0.0
  %372 = vmatpush1.msra.mxu0 0.0
  %373 = vmatprep.subr.mxu0 0.0
  %374 = vmatpush1.msra.mxu0 0.0
  %375 = vmatprep.subr.mxu0 0.0
  %376 = vmatpush1.msra.mxu0 0.0
  %377 = vmatprep.subr.mxu0 0.0
  %378 = vmatpush1.msra.mxu0 0.0
  %379 = vmatprep.subr.mxu0 0.0
  %380 = vmatpush1.msra.mxu0 0.0
  %381 = vmatprep.subr.mxu0 0.0
  %382 = vmatpush1.msra.mxu0 0.0
  %383 = vmatprep.subr.mxu0 0.0
  %384 = vmatpush1.msra.mxu0 0.0
  %385 = vmatprep.subr.mxu0 0.0
  %386 = vmatpush1.msra.mxu0 0.0
  %387 = vmatprep.subr.mxu0 0.0
  %388 = vmatpush1.msra.mxu0 0.0
  %389 = vmatprep.subr.mxu0 0.0
  %390 = vmatpush1.msra.mxu0 0.0
  %391 = vmatprep.subr.mxu0 0.0
  %392 = vmatpush1.msra.mxu0 0.0
  %393 = vmatprep.subr.mxu0 0.0
  %394 = vmatpush1.msra.mxu0 0.0
  %395 = vmatprep.mubr.f32.mxu0 0.0
  %396 = vmatmul.mubr.f32.gmra.mrb[0].mxu0 %v329
  %v397 = vpop.f32.mrb[0].mxu0
  %v398 = vadd.f32 %v327, %v397
  %v399 = vpop.f32.mrb[0].mxu0
  %400 = vdwg.mxu0
  %v401 = vmul.f32 %v128, %v398
  %v402 = vtanh.pop %v401
  %v403 = vmul.f32 %v128, %v402
  %v404 = vadd.f32 %v403, %v129
  %v405 = vmul.f32 %v404, %v317
  %407 = vrot.lane.b32.xlu0 %v404, 64
  %v408 = vpop.permute.xlu0 %407
  %v410 = vmul.f32 %v404, %v408
  %412 = vrot.lane.b32.xlu0 %v410, 32
  %v413 = vpop.permute.xlu0 %412
  %v415 = vadd.f32 %v405, %v413
  %v416 = vtanh.pop %v415
  %418 = vrot.lane.b32.xlu0 %v416, 64
  %v419 = vpop.permute.xlu0 %418
  %v421 = vmul.f32 %v404, %v419
  %423 = vrot.lane.b32.xlu0 %v421, 32
  %v424 = vpop.permute.xlu0 %423
  %v425 = vrot.slane %v111, 6
  %v427 = vsel %vm130, %v424, 0
  %429 = vmatprep.subr.mxu0 0.0
  %430 = vmatpush1.msra.mxu0 %v119
  %431 = vmatprep.subr.mxu0 0.0
  %432 = vmatpush1.msra.mxu0 %v120
  %433 = vmatprep.subr.mxu0 0.0
  %434 = vmatpush1.msra.mxu0 %v121
  %435 = vmatprep.subr.mxu0 0.0
  %436 = vmatpush1.msra.mxu0 %v122
  %437 = vmatprep.subr.mxu0 0.0
  %438 = vmatpush1.msra.mxu0 0.0
  %439 = vmatprep.subr.mxu0 0.0
  %440 = vmatpush1.msra.mxu0 0.0
  %441 = vmatprep.subr.mxu0 0.0
  %442 = vmatpush1.msra.mxu0 0.0
  %443 = vmatprep.subr.mxu0 0.0
  %444 = vmatpush1.msra.mxu0 0.0
  %445 = vmatprep.subr.mxu0 0.0
  %446 = vmatpush1.msra.mxu0 0.0
  %447 = vmatprep.subr.mxu0 0.0
  %448 = vmatpush1.msra.mxu0 0.0
  %449 = vmatprep.subr.mxu0 0.0
  %450 = vmatpush1.msra.mxu0 0.0
  %451 = vmatprep.subr.mxu0 0.0
  %452 = vmatpush1.msra.mxu0 0.0
  %453 = vmatprep.subr.mxu0 0.0
  %454 = vmatpush1.msra.mxu0 0.0
  %455 = vmatprep.subr.mxu0 0.0
  %456 = vmatpush1.msra.mxu0 0.0
  %457 = vmatprep.subr.mxu0 0.0
  %458 = vmatpush1.msra.mxu0 0.0
  %459 = vmatprep.subr.mxu0 0.0
  %460 = vmatpush1.msra.mxu0 0.0
  %461 = vmatprep.subr.mxu0 0.0
  %462 = vmatpush1.msra.mxu0 0.0
  %463 = vmatprep.subr.mxu0 0.0
  %464 = vmatpush1.msra.mxu0 0.0
  %465 = vmatprep.subr.mxu0 0.0
  %466 = vmatpush1.msra.mxu0 0.0
  %467 = vmatprep.subr.mxu0 0.0
  %468 = vmatpush1.msra.mxu0 0.0
  %469 = vmatprep.subr.mxu0 0.0
  %470 = vmatpush1.msra.mxu0 0.0
  %471 = vmatprep.subr.mxu0 0.0
  %472 = vmatpush1.msra.mxu0 0.0
  %473 = vmatprep.subr.mxu0 0.0
  %474 = vmatpush1.msra.mxu0 0.0
  %475 = vmatprep.subr.mxu0 0.0
  %476 = vmatpush1.msra.mxu0 0.0
  %477 = vmatprep.subr.mxu0 0.0
  %478 = vmatpush1.msra.mxu0 0.0
  %479 = vmatprep.subr.mxu0 0.0
  %480 = vmatpush1.msra.mxu0 0.0
  %481 = vmatprep.subr.mxu0 0.0
  %482 = vmatpush1.msra.mxu0 0.0
  %483 = vmatprep.subr.mxu0 0.0
  %484 = vmatpush1.msra.mxu0 0.0
  %485 = vmatprep.subr.mxu0 0.0
  %486 = vmatpush1.msra.mxu0 0.0
  %487 = vmatprep.subr.mxu0 0.0
  %488 = vmatpush1.msra.mxu0 0.0
  %489 = vmatprep.subr.mxu0 0.0
  %490 = vmatpush1.msra.mxu0 0.0
  %491 = vmatprep.subr.mxu0 0.0
  %492 = vmatpush1.msra.mxu0 0.0
  %493 = vmatprep.mubr.f32.mxu0 0.0
  %494 = vmatmul.mubr.f32.gmra.mrb[0].mxu0 %v427
  %v495 = vpop.f32.mrb[0].mxu0
  %v496 = vadd.f32 %v425, %v495
  %v497 = vpop.f32.mrb[0].mxu0
  %498 = vdwg.mxu0
  %v499 = vmul.f32 %v128, %v496
  %v500 = vtanh.pop %v499
  %v501 = vmul.f32 %v128, %v500
  %v502 = vadd.f32 %v501, %v129
  %v503 = vmul.f32 %v502, %v415
  %505 = vrot.lane.b32.xlu0 %v502, 64
  %v506 = vpop.permute.xlu0 %505
  %v508 = vmul.f32 %v502, %v506
  %510 = vrot.lane.b32.xlu0 %v508, 32
  %v511 = vpop.permute.xlu0 %510
  %v513 = vadd.f32 %v503, %v511
  %v514 = vtanh.pop %v513
  %516 = vrot.lane.b32.xlu0 %v514, 64
  %v517 = vpop.permute.xlu0 %516
  %v519 = vmul.f32 %v502, %v517
  %521 = vrot.lane.b32.xlu0 %v519, 32
  %v522 = vpop.permute.xlu0 %521
  %v523 = vsel %vm130, %v522, 0
  %525 = vmatprep.subr.mxu0 0.0
  %526 = vmatpush1.msra.mxu0 %v119
  %527 = vmatprep.subr.mxu0 0.0
  %528 = vmatpush1.msra.mxu0 %v120
  %529 = vmatprep.subr.mxu0 0.0
  %530 = vmatpush1.msra.mxu0 %v121
  %531 = vmatprep.subr.mxu0 0.0
  %532 = vmatpush1.msra.mxu0 %v122
  %533 = vmatprep.subr.mxu0 0.0
  %534 = vmatpush1.msra.mxu0 0.0
  %535 = vmatprep.subr.mxu0 0.0
  %536 = vmatpush1.msra.mxu0 0.0
  %537 = vmatprep.subr.mxu0 0.0
  %538 = vmatpush1.msra.mxu0 0.0
  %539 = vmatprep.subr.mxu0 0.0
  %540 = vmatpush1.msra.mxu0 0.0
  %541 = vmatprep.subr.mxu0 0.0
  %542 = vmatpush1.msra.mxu0 0.0
  %543 = vmatprep.subr.mxu0 0.0
  %544 = vmatpush1.msra.mxu0 0.0
  %545 = vmatprep.subr.mxu0 0.0
  %546 = vmatpush1.msra.mxu0 0.0
  %547 = vmatprep.subr.mxu0 0.0
  %548 = vmatpush1.msra.mxu0 0.0
  %549 = vmatprep.subr.mxu0 0.0
  %550 = vmatpush1.msra.mxu0 0.0
  %551 = vmatprep.subr.mxu0 0.0
  %552 = vmatpush1.msra.mxu0 0.0
  %553 = vmatprep.subr.mxu0 0.0
  %554 = vmatpush1.msra.mxu0 0.0
  %555 = vmatprep.subr.mxu0 0.0
  %556 = vmatpush1.msra.mxu0 0.0
  %557 = vmatprep.subr.mxu0 0.0
  %558 = vmatpush1.msra.mxu0 0.0
  %559 = vmatprep.subr.mxu0 0.0
  %560 = vmatpush1.msra.mxu0 0.0
  %561 = vmatprep.subr.mxu0 0.0
  %562 = vmatpush1.msra.mxu0 0.0
  %563 = vmatprep.subr.mxu0 0.0
  %564 = vmatpush1.msra.mxu0 0.0
  %565 = vmatprep.subr.mxu0 0.0
  %566 = vmatpush1.msra.mxu0 0.0
  %567 = vmatprep.subr.mxu0 0.0
  %568 = vmatpush1.msra.mxu0 0.0
  %569 = vmatprep.subr.mxu0 0.0
  %570 = vmatpush1.msra.mxu0 0.0
  %571 = vmatprep.subr.mxu0 0.0
  %572 = vmatpush1.msra.mxu0 0.0
  %573 = vmatprep.subr.mxu0 0.0
  %574 = vmatpush1.msra.mxu0 0.0
  %575 = vmatprep.subr.mxu0 0.0
  %576 = vmatpush1.msra.mxu0 0.0
  %577 = vmatprep.subr.mxu0 0.0
  %578 = vmatpush1.msra.mxu0 0.0
  %579 = vmatprep.subr.mxu0 0.0
  %580 = vmatpush1.msra.mxu0 0.0
  %581 = vmatprep.subr.mxu0 0.0
  %582 = vmatpush1.msra.mxu0 0.0
  %583 = vmatprep.subr.mxu0 0.0
  %584 = vmatpush1.msra.mxu0 0.0
  %585 = vmatprep.subr.mxu0 0.0
  %586 = vmatpush1.msra.mxu0 0.0
  %587 = vmatprep.subr.mxu0 0.0
  %588 = vmatpush1.msra.mxu0 0.0
  %589 = vmatprep.mubr.f32.mxu0 0.0
  %590 = vmatmul.mubr.f32.gmra.mrb[0].mxu0 %v523
  %v591 = vpop.f32.mrb[0].mxu0
  %v592 = vadd.f32 %v116, %v591
  %v593 = vpop.f32.mrb[0].mxu0
  %594 = vdwg.mxu0
  %v595 = vmul.f32 %v128, %v592
  %v596 = vtanh.pop %v595
  %v597 = vmul.f32 %v128, %v596
  %v598 = vadd.f32 %v597, %v129
  %v599 = vmul.f32 %v598, %v513
  %601 = vrot.lane.b32.xlu0 %v598, 64
  %v602 = vpop.permute.xlu0 %601
  %v604 = vmul.f32 %v598, %v602
  %606 = vrot.lane.b32.xlu0 %v604, 32
  %v607 = vpop.permute.xlu0 %606
  %v609 = vadd.f32 %v599, %v607
  %v610 = vtanh.pop %v609
  %612 = vrot.lane.b32.xlu0 %v610, 64
  %v613 = vpop.permute.xlu0 %612
  %v615 = vmul.f32 %v598, %v613
  %617 = vrot.lane.b32.xlu0 %v615, 32
  %v618 = vpop.permute.xlu0 %617
  %v620 = vrot.slane %v116, 2
  %v622 = vsel %vm130, %v618, 0
  %624 = vmatprep.subr.mxu0 0.0
  %625 = vmatpush1.msra.mxu0 %v119
  %626 = vmatprep.subr.mxu0 0.0
  %627 = vmatpush1.msra.mxu0 %v120
  %628 = vmatprep.subr.mxu0 0.0
  %629 = vmatpush1.msra.mxu0 %v121
  %630 = vmatprep.subr.mxu0 0.0
  %631 = vmatpush1.msra.mxu0 %v122
  %632 = vmatprep.subr.mxu0 0.0
  %633 = vmatpush1.msra.mxu0 0.0
  %634 = vmatprep.subr.mxu0 0.0
  %635 = vmatpush1.msra.mxu0 0.0
  %636 = vmatprep.subr.mxu0 0.0
  %637 = vmatpush1.msra.mxu0 0.0
  %638 = vmatprep.subr.mxu0 0.0
  %639 = vmatpush1.msra.mxu0 0.0
  %640 = vmatprep.subr.mxu0 0.0
  %641 = vmatpush1.msra.mxu0 0.0
  %642 = vmatprep.subr.mxu0 0.0
  %643 = vmatpush1.msra.mxu0 0.0
  %644 = vmatprep.subr.mxu0 0.0
  %645 = vmatpush1.msra.mxu0 0.0
  %646 = vmatprep.subr.mxu0 0.0
  %647 = vmatpush1.msra.mxu0 0.0
  %648 = vmatprep.subr.mxu0 0.0
  %649 = vmatpush1.msra.mxu0 0.0
  %650 = vmatprep.subr.mxu0 0.0
  %651 = vmatpush1.msra.mxu0 0.0
  %652 = vmatprep.subr.mxu0 0.0
  %653 = vmatpush1.msra.mxu0 0.0
  %654 = vmatprep.subr.mxu0 0.0
  %655 = vmatpush1.msra.mxu0 0.0
  %656 = vmatprep.subr.mxu0 0.0
  %657 = vmatpush1.msra.mxu0 0.0
  %658 = vmatprep.subr.mxu0 0.0
  %659 = vmatpush1.msra.mxu0 0.0
  %660 = vmatprep.subr.mxu0 0.0
  %661 = vmatpush1.msra.mxu0 0.0
  %662 = vmatprep.subr.mxu0 0.0
  %663 = vmatpush1.msra.mxu0 0.0
  %664 = vmatprep.subr.mxu0 0.0
  %665 = vmatpush1.msra.mxu0 0.0
  %666 = vmatprep.subr.mxu0 0.0
  %667 = vmatpush1.msra.mxu0 0.0
  %668 = vmatprep.subr.mxu0 0.0
  %669 = vmatpush1.msra.mxu0 0.0
  %670 = vmatprep.subr.mxu0 0.0
  %671 = vmatpush1.msra.mxu0 0.0
  %672 = vmatprep.subr.mxu0 0.0
  %673 = vmatpush1.msra.mxu0 0.0
  %674 = vmatprep.subr.mxu0 0.0
  %675 = vmatpush1.msra.mxu0 0.0
  %676 = vmatprep.subr.mxu0 0.0
  %677 = vmatpush1.msra.mxu0 0.0
  %678 = vmatprep.subr.mxu0 0.0
  %679 = vmatpush1.msra.mxu0 0.0
  %680 = vmatprep.subr.mxu0 0.0
  %681 = vmatpush1.msra.mxu0 0.0
  %682 = vmatprep.subr.mxu0 0.0
  %683 = vmatpush1.msra.mxu0 0.0
  %684 = vmatprep.subr.mxu0 0.0
  %685 = vmatpush1.msra.mxu0 0.0
  %686 = vmatprep.subr.mxu0 0.0
  %687 = vmatpush1.msra.mxu0 0.0
  %688 = vmatprep.mubr.f32.mxu0 0.0
  %689 = vmatmul.mubr.f32.gmra.mrb[0].mxu0 %v622
  %v690 = vpop.f32.mrb[0].mxu0
  %v691 = vadd.f32 %v620, %v690
  %v692 = vpop.f32.mrb[0].mxu0
  %693 = vdwg.mxu0
  %v694 = vmul.f32 %v128, %v691
  %v695 = vtanh.pop %v694
  %v696 = vmul.f32 %v128, %v695
  %v697 = vadd.f32 %v696, %v129
  %v698 = vmul.f32 %v697, %v609
  %700 = vrot.lane.b32.xlu0 %v697, 64
  %v701 = vpop.permute.xlu0 %700
  %v703 = vmul.f32 %v697, %v701
  %705 = vrot.lane.b32.xlu0 %v703, 32
  %v706 = vpop.permute.xlu0 %705
  %v708 = vadd.f32 %v698, %v706
  %v709 = vtanh.pop %v708
  %711 = vrot.lane.b32.xlu0 %v709, 64
  %v712 = vpop.permute.xlu0 %711
  %v714 = vmul.f32 %v697, %v712
  %716 = vrot.lane.b32.xlu0 %v714, 32
  %v717 = vpop.permute.xlu0 %716
  %v718 = vrot.slane %v116, 4
  %v720 = vsel %vm130, %v717, 0
  %722 = vmatprep.subr.mxu0 0.0
  %723 = vmatpush1.msra.mxu0 %v119
  %724 = vmatprep.subr.mxu0 0.0
  %725 = vmatpush1.msra.mxu0 %v120
  %726 = vmatprep.subr.mxu0 0.0
  %727 = vmatpush1.msra.mxu0 %v121
  %728 = vmatprep.subr.mxu0 0.0
  %729 = vmatpush1.msra.mxu0 %v122
  %730 = vmatprep.subr.mxu0 0.0
  %731 = vmatpush1.msra.mxu0 0.0
  %732 = vmatprep.subr.mxu0 0.0
  %733 = vmatpush1.msra.mxu0 0.0
  %734 = vmatprep.subr.mxu0 0.0
  %735 = vmatpush1.msra.mxu0 0.0
  %736 = vmatprep.subr.mxu0 0.0
  %737 = vmatpush1.msra.mxu0 0.0
  %738 = vmatprep.subr.mxu0 0.0
  %739 = vmatpush1.msra.mxu0 0.0
  %740 = vmatprep.subr.mxu0 0.0
  %741 = vmatpush1.msra.mxu0 0.0
  %742 = vmatprep.subr.mxu0 0.0
  %743 = vmatpush1.msra.mxu0 0.0
  %744 = vmatprep.subr.mxu0 0.0
  %745 = vmatpush1.msra.mxu0 0.0
  %746 = vmatprep.subr.mxu0 0.0
  %747 = vmatpush1.msra.mxu0 0.0
  %748 = vmatprep.subr.mxu0 0.0
  %749 = vmatpush1.msra.mxu0 0.0
  %750 = vmatprep.subr.mxu0 0.0
  %751 = vmatpush1.msra.mxu0 0.0
  %752 = vmatprep.subr.mxu0 0.0
  %753 = vmatpush1.msra.mxu0 0.0
  %754 = vmatprep.subr.mxu0 0.0
  %755 = vmatpush1.msra.mxu0 0.0
  %756 = vmatprep.subr.mxu0 0.0
  %757 = vmatpush1.msra.mxu0 0.0
  %758 = vmatprep.subr.mxu0 0.0
  %759 = vmatpush1.msra.mxu0 0.0
  %760 = vmatprep.subr.mxu0 0.0
  %761 = vmatpush1.msra.mxu0 0.0
  %762 = vmatprep.subr.mxu0 0.0
  %763 = vmatpush1.msra.mxu0 0.0
  %764 = vmatprep.subr.mxu0 0.0
  %765 = vmatpush1.msra.mxu0 0.0
  %766 = vmatprep.subr.mxu0 0.0
  %767 = vmatpush1.msra.mxu0 0.0
  %768 = vmatprep.subr.mxu0 0.0
  %769 = vmatpush1.msra.mxu0 0.0
  %770 = vmatprep.subr.mxu0 0.0
  %771 = vmatpush1.msra.mxu0 0.0
  %772 = vmatprep.subr.mxu0 0.0
  %773 = vmatpush1.msra.mxu0 0.0
  %774 = vmatprep.subr.mxu0 0.0
  %775 = vmatpush1.msra.mxu0 0.0
  %776 = vmatprep.subr.mxu0 0.0
  %777 = vmatpush1.msra.mxu0 0.0
  %778 = vmatprep.subr.mxu0 0.0
  %779 = vmatpush1.msra.mxu0 0.0
  %780 = vmatprep.subr.mxu0 0.0
  %781 = vmatpush1.msra.mxu0 0.0
  %782 = vmatprep.subr.mxu0 0.0
  %783 = vmatpush1.msra.mxu0 0.0
  %784 = vmatprep.subr.mxu0 0.0
  %785 = vmatpush1.msra.mxu0 0.0
  %786 = vmatprep.mubr.f32.mxu0 0.0
  %787 = vmatmul.mubr.f32.gmra.mrb[0].mxu0 %v720
  %v788 = vpop.f32.mrb[0].mxu0
  %v789 = vadd.f32 %v718, %v788
  %v790 = vpop.f32.mrb[0].mxu0
  %791 = vdwg.mxu0
  %v792 = vmul.f32 %v128, %v789
  %v793 = vtanh.pop %v792
  %v794 = vmul.f32 %v128, %v793
  %v795 = vadd.f32 %v794, %v129
  %v796 = vmul.f32 %v795, %v708
  %798 = vrot.lane.b32.xlu0 %v795, 64
  %v799 = vpop.permute.xlu0 %798
  %v801 = vmul.f32 %v795, %v799
  %803 = vrot.lane.b32.xlu0 %v801, 32
  %v804 = vpop.permute.xlu0 %803
  %v806 = vadd.f32 %v796, %v804
  %v807 = vtanh.pop %v806
  %809 = vrot.lane.b32.xlu0 %v807, 64
  %v810 = vpop.permute.xlu0 %809
  %v812 = vmul.f32 %v795, %v810
  %814 = vrot.lane.b32.xlu0 %v812, 32
  %v815 = vpop.permute.xlu0 %814
  %v816 = vrot.slane %v116, 6
  %v818 = vsel %vm130, %v815, 0
  %820 = vmatprep.subr.mxu0 0.0
  %821 = vmatpush1.msra.mxu0 %v119
  %822 = vmatprep.subr.mxu0 0.0
  %823 = vmatpush1.msra.mxu0 %v120
  %824 = vmatprep.subr.mxu0 0.0
  %825 = vmatpush1.msra.mxu0 %v121
  %826 = vmatprep.subr.mxu0 0.0
  %827 = vmatpush1.msra.mxu0 %v122
  %828 = vmatprep.subr.mxu0 0.0
  %829 = vmatpush1.msra.mxu0 0.0
  %830 = vmatprep.subr.mxu0 0.0
  %831 = vmatpush1.msra.mxu0 0.0
  %832 = vmatprep.subr.mxu0 0.0
  %833 = vmatpush1.msra.mxu0 0.0
  %834 = vmatprep.subr.mxu0 0.0
  %835 = vmatpush1.msra.mxu0 0.0
  %836 = vmatprep.subr.mxu0 0.0
  %837 = vmatpush1.msra.mxu0 0.0
  %838 = vmatprep.subr.mxu0 0.0
  %839 = vmatpush1.msra.mxu0 0.0
  %840 = vmatprep.subr.mxu0 0.0
  %841 = vmatpush1.msra.mxu0 0.0
  %842 = vmatprep.subr.mxu0 0.0
  %843 = vmatpush1.msra.mxu0 0.0
  %844 = vmatprep.subr.mxu0 0.0
  %845 = vmatpush1.msra.mxu0 0.0
  %846 = vmatprep.subr.mxu0 0.0
  %847 = vmatpush1.msra.mxu0 0.0
  %848 = vmatprep.subr.mxu0 0.0
  %849 = vmatpush1.msra.mxu0 0.0
  %850 = vmatprep.subr.mxu0 0.0
  %851 = vmatpush1.msra.mxu0 0.0
  %852 = vmatprep.subr.mxu0 0.0
  %853 = vmatpush1.msra.mxu0 0.0
  %854 = vmatprep.subr.mxu0 0.0
  %855 = vmatpush1.msra.mxu0 0.0
  %856 = vmatprep.subr.mxu0 0.0
  %857 = vmatpush1.msra.mxu0 0.0
  %858 = vmatprep.subr.mxu0 0.0
  %859 = vmatpush1.msra.mxu0 0.0
  %860 = vmatprep.subr.mxu0 0.0
  %861 = vmatpush1.msra.mxu0 0.0
  %862 = vmatprep.subr.mxu0 0.0
  %863 = vmatpush1.msra.mxu0 0.0
  %864 = vmatprep.subr.mxu0 0.0
  %865 = vmatpush1.msra.mxu0 0.0
  %866 = vmatprep.subr.mxu0 0.0
  %867 = vmatpush1.msra.mxu0 0.0
  %868 = vmatprep.subr.mxu0 0.0
  %869 = vmatpush1.msra.mxu0 0.0
  %870 = vmatprep.subr.mxu0 0.0
  %871 = vmatpush1.msra.mxu0 0.0
  %872 = vmatprep.subr.mxu0 0.0
  %873 = vmatpush1.msra.mxu0 0.0
  %874 = vmatprep.subr.mxu0 0.0
  %875 = vmatpush1.msra.mxu0 0.0
  %876 = vmatprep.subr.mxu0 0.0
  %877 = vmatpush1.msra.mxu0 0.0
  %878 = vmatprep.subr.mxu0 0.0
  %879 = vmatpush1.msra.mxu0 0.0
  %880 = vmatprep.subr.mxu0 0.0
  %881 = vmatpush1.msra.mxu0 0.0
  %882 = vmatprep.subr.mxu0 0.0
  %883 = vmatpush1.msra.mxu0 0.0
  %884 = vmatprep.mubr.f32.mxu0 0.0
  %885 = vmatmul.mubr.f32.gmra.mrb[0].mxu0 %v818
  %v886 = vpop.f32.mrb[0].mxu0
  %v887 = vadd.f32 %v816, %v886
  %v888 = vpop.f32.mrb[0].mxu0
  %889 = vdwg.mxu0
  %v890 = vmul.f32 %v128, %v887
  %v891 = vtanh.pop %v890
  %v892 = vmul.f32 %v128, %v891
  %v893 = vadd.f32 %v892, %v129
  %v894 = vmul.f32 %v893, %v806
  %896 = vrot.lane.b32.xlu0 %v893, 64
  %v897 = vpop.permute.xlu0 %896
  %v899 = vmul.f32 %v893, %v897
  %901 = vrot.lane.b32.xlu0 %v899, 32
  %v902 = vpop.permute.xlu0 %901
  %v904 = vadd.f32 %v894, %v902
  %v905 = vtanh.pop %v904
  %907 = vrot.lane.b32.xlu0 %v905, 64
  %v908 = vpop.permute.xlu0 %907
  %v910 = vmul.f32 %v893, %v908
  %v911 = vrot.slane %v323, 6
  %v913 = vrot.slane %v421, 4
  %v915 = vrot.slane %v519, 2
  %v917 = vrot.slane %v714, 6
  %v919 = vrot.slane %v812, 4
  %v922 = vrot.slane %v910, 2
  %v924 = vsel %vm40, %v224, %v911
  %vm925 = vcmask 1043456
  %v926 = vsel %vm925, %v924, %v913
  %vm927 = vcmask 1045504
  %v928 = vsel %vm927, %v926, %v915
  %v929 = vsel %vm40, %v615, %v917
  %v930 = vsel %vm925, %v929, %v919
  %v931 = vsel %vm927, %v930, %v922
  %v932 = vld [vmem:[%s4] sm:$0xff]
  %v933 = vld [vmem:[%s4 + $0x8] sm:$0xff]
  %v934 = vld [vmem:[%s4 + $0x10] sm:$0xff]
  %v935 = vld [vmem:[%s4 + $0x18] sm:$0xff]
  %v936 = vld [vmem:[%s5] sm:$0x1]
  %v938 = vlaneseq
  %v939 = vshrl.u32 %v938, 7
  %v940 = vsub.s32 0, %v939
  %v941 = vrot.slane %v936, %v940
  %945 = vrot.lane.b32.xlu0 %v928, 32
  %v946 = vpop.permute.xlu0 %945
  %947 = vrot.lane.b32.xlu0 %v931, 32
  %v948 = vpop.permute.xlu0 %947
  %v949 = vsel %vm130, %v946, 0
  %v951 = vsel %vm130, %v948, 0
  %953 = vmatprep.subr.mxu0 0.0
  %954 = vmatpush1.msra.mxu0 %v932
  %955 = vmatprep.subr.mxu0 0.0
  %956 = vmatpush1.msra.mxu0 %v933
  %957 = vmatprep.subr.mxu0 0.0
  %958 = vmatpush1.msra.mxu0 %v934
  %959 = vmatprep.subr.mxu0 0.0
  %960 = vmatpush1.msra.mxu0 %v935
  %961 = vmatprep.subr.mxu0 0.0
  %962 = vmatpush1.msra.mxu0 0.0
  %963 = vmatprep.subr.mxu0 0.0
  %964 = vmatpush1.msra.mxu0 0.0
  %965 = vmatprep.subr.mxu0 0.0
  %966 = vmatpush1.msra.mxu0 0.0
  %967 = vmatprep.subr.mxu0 0.0
  %968 = vmatpush1.msra.mxu0 0.0
  %969 = vmatprep.subr.mxu0 0.0
  %970 = vmatpush1.msra.mxu0 0.0
  %971 = vmatprep.subr.mxu0 0.0
  %972 = vmatpush1.msra.mxu0 0.0
  %973 = vmatprep.subr.mxu0 0.0
  %974 = vmatpush1.msra.mxu0 0.0
  %975 = vmatprep.subr.mxu0 0.0
  %976 = vmatpush1.msra.mxu0 0.0
  %977 = vmatprep.subr.mxu0 0.0
  %978 = vmatpush1.msra.mxu0 0.0
  %979 = vmatprep.subr.mxu0 0.0
  %980 = vmatpush1.msra.mxu0 0.0
  %981 = vmatprep.subr.mxu0 0.0
  %982 = vmatpush1.msra.mxu0 0.0
  %983 = vmatprep.subr.mxu0 0.0
  %984 = vmatpush1.msra.mxu0 0.0
  %985 = vmatprep.subr.mxu0 0.0
  %986 = vmatpush1.msra.mxu0 0.0
  %987 = vmatprep.subr.mxu0 0.0
  %988 = vmatpush1.msra.mxu0 0.0
  %989 = vmatprep.subr.mxu0 0.0
  %990 = vmatpush1.msra.mxu0 0.0
  %991 = vmatprep.subr.mxu0 0.0
  %992 = vmatpush1.msra.mxu0 0.0
  %993 = vmatprep.subr.mxu0 0.0
  %994 = vmatpush1.msra.mxu0 0.0
  %995 = vmatprep.subr.mxu0 0.0
  %996 = vmatpush1.msra.mxu0 0.0
  %997 = vmatprep.subr.mxu0 0.0
  %998 = vmatpush1.msra.mxu0 0.0
  %999 = vmatprep.subr.mxu0 0.0
  %1000 = vmatpush1.msra.mxu0 0.0
  %1001 = vmatprep.subr.mxu0 0.0
  %1002 = vmatpush1.msra.mxu0 0.0
  %1003 = vmatprep.subr.mxu0 0.0
  %1004 = vmatpush1.msra.mxu0 0.0
  %1005 = vmatprep.subr.mxu0 0.0
  %1006 = vmatpush1.msra.mxu0 0.0
  %1007 = vmatprep.subr.mxu0 0.0
  %1008 = vmatpush1.msra.mxu0 0.0
  %1009 = vmatprep.subr.mxu0 0.0
  %1010 = vmatpush1.msra.mxu0 0.0
  %1011 = vmatprep.subr.mxu0 0.0
  %1012 = vmatpush1.msra.mxu0 0.0
  %1013 = vmatprep.subr.mxu0 0.0
  %1014 = vmatpush1.msra.mxu0 0.0
  %1015 = vmatprep.subr.mxu0 0.0
  %1016 = vmatpush1.msra.mxu0 0.0
  %1017 = vmatprep.mubr.f32.mxu0 0.0
  %1018 = vmatmul.mubr.f32.gmra.mrb[0].mxu0 %v949
  %v1019 = vpop.f32.mrb[0].mxu0
  %v1020 = vadd.f32 %v941, %v1019
  %v1021 = vpop.f32.mrb[0].mxu0
  %1022 = vmatprep.mubr.f32.mxu0 0.0
  %1023 = vmatmul.mubr.f32.gmra.mrb[0].mxu0 %v951
  %v1024 = vpop.f32.mrb[0].mxu0
  %v1025 = vadd.f32 %v941, %v1024
  %v1026 = vpop.f32.mrb[0].mxu0
  %1027 = vdwg.mxu0
  %v1028 = vtanh.pop %v1020
  %v1029 = vtanh.pop %v1025
  %1030 = vst.msk [vmem:[%s6] sm:$0xff] %vm33, %v1028
  %1031 = vst.msk [vmem:[%s6 + $0x8] sm:$0xff] %vm33, %v1029
  // Predicated region
  $region26: #{doa_model_mtm_forward.1} parent=0 // pred_check
    _
  $region27: #{doa_model_mtm_forward.1} parent=0 // pred_check_branch
    %1033 = sbr.rel (0) target = $region29
  $region28: #{doa_model_mtm_forward.1} parent=0 // pred_region
    _
  $region29: #{doa_model_mtm_forward.1} parent=0 // pred_fallthru
    _
  // Predicated region
  $region30: #{doa_model_mtm_forward.1} parent=0 // pred_check
    _
  $region31: #{doa_model_mtm_forward.1} parent=0 // pred_check_branch
    %1035 = sbr.rel (0) target = $region33
  $region32: #{doa_model_mtm_forward.1} parent=0 // pred_region
    _
  $region33: #{doa_model_mtm_forward.1} parent=0 // pred_fallthru
    _

</llo_original>
